<compile_context>
chip_gen: v7x
topology: tpu7x:2x2x1
jax: 0.10.0
libtpu: 0.0.40
codegen_flags: <defaults>
</compile_context>

<pallas_src>
import jax
import jax.numpy as jnp
from jax.experimental import pallas as pl
from jax.experimental.pallas import tpu as pltpu


def _round_up(x, m):
    return ((x + m - 1) // m) * m


def mlp_kernel(b_ref, a_ref,          # activation tiles        (TILE_N, D)  f32
               w1_ref, b1_ref,        # layer 1: (2D, D) bf16 / (1, D) f32
               w2_ref, b2_ref,        # layer 2: (D, H2) bf16 / (1, H2) f32
               w3t_ref, b3_ref,       # layer 3: (8, H2) bf16 (row 0 real) / (1,) f32 in SMEM
               o_ref):                # output tile             (1, 1, TILE_N) f32
    """Fused 3-layer MLP over one batch tile. Weights are VMEM-resident."""
    D = b_ref.shape[1]

    # Cast activations to bf16 so every matmul hits the bf16 MXU fast path
    # (f32 accumulation is requested explicitly on each dot).
    b = b_ref[...].astype(jnp.bfloat16)
    a = a_ref[...].astype(jnp.bfloat16)

    # ---- Layer 1: Linear(2D -> D) + ReLU.  Concat folded into two matmuls on
    #      zero-cost ref views of the resident W1.
    h1 = (jnp.dot(b, w1_ref[:D, :], preferred_element_type=jnp.float32)
          + jnp.dot(a, w1_ref[D:, :], preferred_element_type=jnp.float32)
          + b1_ref[...])
    h1 = jnp.maximum(h1, 0.0).astype(jnp.bfloat16)

    # ---- Layer 2: Linear(D -> D//2) + ReLU.
    h2 = jnp.dot(h1, w2_ref[...], preferred_element_type=jnp.float32) + b2_ref[...]
    h2 = jnp.maximum(h2, 0.0).astype(jnp.bfloat16)

    # ---- Layer 3: Linear(D//2 -> 1) + Sigmoid, computed lane-major:
    #      (8, H2) contracted with (TILE_N, H2) on the feature axis gives
    #      (8, TILE_N); row 0 is the real output (rows 1..7 of W3^T are zero
    #      padding).  Batch lands on the lane axis -> lane-dense store.
    logits8 = jax.lax.dot_general(
        w3t_ref[...], h2,
        dimension_numbers=(((1,), (1,)), ((), ())),
        preferred_element_type=jnp.float32)
    logits_t = logits8[0:1, :] + b3_ref[0]                 # (1, TILE_N)

    # Numerically stable sigmoid via tanh (EUP slot): sig(x) = 0.5*(tanh(x/2)+1).
    out_t = 0.5 * (jnp.tanh(0.5 * logits_t) + 1.0)
    o_ref[...] = out_t.reshape(o_ref.shape).astype(o_ref.dtype)


def mlp_forward(B_feature, A_feature, params, *, tile_n=256):
    """Fused MLP forward.  B_feature / A_feature: (N, input_dim) float32."""
    w1, b1, w2, b2, w3, b3 = params
    N, D = B_feature.shape
    D2 = w1.shape[1]              # input_dim
    H2 = w2.shape[1]              # input_dim // 2
    assert w1.shape[0] == 2 * D

    # Batch tiling: TILE_N rows per grid step (multiple of 8 sublanes).
    tile_n = min(tile_n, _round_up(max(N, 1), 8))
    tile_n = _round_up(tile_n, 8)
    n_pad = _round_up(N, tile_n)
    nt = n_pad // tile_n
    if n_pad != N:
        pad = ((0, n_pad - N), (0, 0))
        B_feature = jnp.pad(B_feature, pad)
        A_feature = jnp.pad(A_feature, pad)

    # Weights for the MXU path, passed whole (sliced in-kernel).  W3 is stored
    # transposed and padded to 8 sublane rows (row 0 real, rest zero) so the
    # final matmul produces a lane-major (batch-on-lanes) result.
    w1_bf = w1.astype(jnp.bfloat16)                                # (2D, D2)
    w2_bf = w2.astype(jnp.bfloat16)                                # (D2, H2)
    w3t_bf = jnp.pad(w3.T.astype(jnp.bfloat16), ((0, 7), (0, 0)))  # (8, H2)
    b1_r = b1.reshape(1, D2).astype(jnp.float32)
    b2_r = b2.reshape(1, H2).astype(jnp.float32)
    b3_s = b3.reshape(1).astype(jnp.float32)                       # scalar -> SMEM

    const = lambda shape: pl.BlockSpec(shape, lambda i: tuple(0 for _ in shape))

    out = pl.pallas_call(
        mlp_kernel,
        out_shape=jax.ShapeDtypeStruct((nt, 1, tile_n), jnp.float32),
        grid_spec=pltpu.PrefetchScalarGridSpec(
            num_scalar_prefetch=0,
            grid=(nt,),
            in_specs=[
                pl.BlockSpec((tile_n, D), lambda i: (i, 0)),        # B tile
                pl.BlockSpec((tile_n, D), lambda i: (i, 0)),        # A tile
                const((2 * D, D2)),                                 # W1 (resident)
                const((1, D2)),                                     # b1
                const((D2, H2)),                                    # W2
                const((1, H2)),                                     # b2
                const((8, H2)),                                     # W3^T (padded)
                pl.BlockSpec(memory_space=pltpu.MemorySpace.SMEM),  # b3 scalar
            ],
            out_specs=pl.BlockSpec((1, 1, tile_n), lambda i: (i, 0, 0)),
        ),
        compiler_params=pltpu.CompilerParams(
            # Independent batch tiles -> sharded across TensorCores on v7x.
            dimension_semantics=("parallel",),
            # NOTE: at these feature sizes VMEM use is tiny (well under the
            # default scoped limit).  When scaling input_dim — especially on
            # v7x's 64 MiB VMEM — re-budget weight residency, add a K-tiled
            # "arbitrary" grid axis with an f32 accumulator scratch, and set
            # vmem_limit_bytes explicitly.
        ),
    )(B_feature, A_feature, w1_bf, b1_r, w2_bf, b2_r, w3t_bf, b3_s)

    # Lane-major (nt, 1, tile_n) -> (N, 1).
    return out.reshape(n_pad, 1)[:N]


def init_params(key, input_dim):
    """Deterministic parameter init (PyTorch Linear-style uniform ranges).

    Weights are stored already transposed: W has shape (in_features, out_features).
    """
    d = input_dim
    keys = jax.random.split(key, 6)

    def lin(kw, kb, fan_in, fan_out):
        bound = 1.0 / jnp.sqrt(fan_in)
        w = jax.random.uniform(kw, (fan_in, fan_out), jnp.float32, -bound, bound)
        b = jax.random.uniform(kb, (fan_out,), jnp.float32, -bound, bound)
        return w, b

    w1, b1 = lin(keys[0], keys[1], 2 * d, d)
    w2, b2 = lin(keys[2], keys[3], d, d // 2)
    w3, b3 = lin(keys[4], keys[5], d // 2, 1)
    return (w1, b1, w2, b2, w3, b3)


def mlp_reference(B_feature, A_feature, params, matmul_dtype=jnp.float32):
    """Pure-JAX reference.  matmul_dtype=bfloat16 mirrors the kernel's MXU casts."""
    w1, b1, w2, b2, w3, b3 = params
    md = matmul_dtype
    x = jnp.concatenate([B_feature, A_feature], axis=1)
    h1 = jax.nn.relu(jnp.dot(x.astype(md), w1.astype(md),
                             preferred_element_type=jnp.float32) + b1)
    h2 = jax.nn.relu(jnp.dot(h1.astype(md), w2.astype(md),
                             preferred_element_type=jnp.float32) + b2)
    logits = jnp.dot(h2.astype(md), w3.astype(md),
                     preferred_element_type=jnp.float32) + b3
    return jax.nn.sigmoid(logits)


if __name__ == "__main__":
    key = jax.random.PRNGKey(0)
    k_b, k_a, k_p = jax.random.split(key, 3)

    N = 80            # batch of B-A pairs (not a tile multiple -> exercises padding)
    input_dim = 32    # module's input_dim

    B_feature = jax.random.normal(k_b, (N, input_dim), jnp.float32)
    A_feature = jax.random.normal(k_a, (N, input_dim), jnp.float32)
    params = init_params(k_p, input_dim)

    # Single-tile call (default tile covers the whole small batch) ...
    out = jax.block_until_ready(mlp_forward(B_feature, A_feature, params))
    # ... and a multi-step grid call (3 batch tiles of 32 rows + padding).
    out_tiled = jax.block_until_ready(
        mlp_forward(B_feature, A_feature, params, tile_n=32))

    assert out.shape == (N, 1) and out_tiled.shape == (N, 1)

    # Tight check against a reference that mirrors the kernel's bf16 MXU casts.
    ref_bf16 = mlp_reference(B_feature, A_feature, params, matmul_dtype=jnp.bfloat16)
    assert jnp.allclose(out, ref_bf16, atol=1e-4, rtol=1e-4), "mismatch vs bf16 reference"
    assert jnp.allclose(out_tiled, ref_bf16, atol=1e-4, rtol=1e-4), "tiled mismatch vs bf16 reference"

    # Loose sanity check against exact f32 module semantics (bounds bf16 MXU error).
    ref_f32 = mlp_reference(B_feature, A_feature, params, matmul_dtype=jnp.float32)
    assert jnp.allclose(out, ref_f32, atol=5e-2), "mismatch vs f32 reference"

    print("KERNEL_OK")
</pallas_src>

<mosaic_0001>
module attributes {stable_mosaic.version = 11 : i64} {
  func.func @mlp_kernel(%arg0: i32, %arg1: memref<80x32xf32, #tpu.memory_space<vmem>>, %arg2: memref<80x32xf32, #tpu.memory_space<vmem>>, %arg3: memref<64x32xbf16, #tpu.memory_space<vmem>>, %arg4: memref<1x32xf32, #tpu.memory_space<vmem>>, %arg5: memref<32x16xbf16, #tpu.memory_space<vmem>>, %arg6: memref<1x16xf32, #tpu.memory_space<vmem>>, %arg7: memref<8x16xbf16, #tpu.memory_space<vmem>>, %arg8: memref<1xf32, #tpu.memory_space<smem>>, %arg9: memref<1x1x80xf32, #tpu.memory_space<vmem>>) attributes {dimension_semantics = [#tpu.dimension_semantics<parallel>], iteration_bounds = array<i64: 1>, scalar_prefetch = 0 : i64, scratch_operands = 0 : i64, tpu.core_type = #tpu.core_type<tc>, window_params = [{transform_indices = @transform_0, window_bounds = array<i64: 80, 32>}, {transform_indices = @transform_1, window_bounds = array<i64: 80, 32>}, {pipeline_mode = #tpu.pipeline_mode<synchronous>, transform_indices = @transform_2, window_bounds = array<i64: 64, 32>}, {pipeline_mode = #tpu.pipeline_mode<synchronous>, transform_indices = @transform_3, window_bounds = array<i64: 1, 32>}, {pipeline_mode = #tpu.pipeline_mode<synchronous>, transform_indices = @transform_4, window_bounds = array<i64: 32, 16>}, {pipeline_mode = #tpu.pipeline_mode<synchronous>, transform_indices = @transform_5, window_bounds = array<i64: 1, 16>}, {pipeline_mode = #tpu.pipeline_mode<synchronous>, transform_indices = @transform_6, window_bounds = array<i64: 8, 16>}, {transform_indices = @transform_7, window_bounds = array<i64: 1>}, {transform_indices = @transform_8, window_bounds = array<i64: 1, 1, 80>}]} {
    %c0 = arith.constant 0 : index
    %c0_0 = arith.constant 0 : index
    %0 = vector.load %arg1[%c0, %c0_0] : memref<80x32xf32, #tpu.memory_space<vmem>>, vector<80x32xf32>
    %1 = arith.truncf %0 : vector<80x32xf32> to vector<80x32xbf16>
    %c0_1 = arith.constant 0 : index
    %c0_2 = arith.constant 0 : index
    %2 = vector.load %arg2[%c0_1, %c0_2] : memref<80x32xf32, #tpu.memory_space<vmem>>, vector<80x32xf32>
    %3 = arith.truncf %2 : vector<80x32xf32> to vector<80x32xbf16>
    %c0_3 = arith.constant 0 : index
    %c0_4 = arith.constant 0 : index
    %4 = vector.load %arg3[%c0_3, %c0_4] : memref<64x32xbf16, #tpu.memory_space<vmem>>, vector<32x32xbf16>
    %cst = arith.constant dense<0.000000e+00> : vector<80x32xf32>
    %5 = tpu.matmul %1, %4, %cst {dimension_numbers = #tpu.dot_dimension_numbers<[1], [0], [0], [1], [0, 0, 1, 1], [], []>} : vector<80x32xbf16>, vector<32x32xbf16>, vector<80x32xf32> -> vector<80x32xf32>
    %c32 = arith.constant 32 : index
    %c0_5 = arith.constant 0 : index
    %6 = vector.load %arg3[%c32, %c0_5] : memref<64x32xbf16, #tpu.memory_space<vmem>>, vector<32x32xbf16>
    %cst_6 = arith.constant dense<0.000000e+00> : vector<80x32xf32>
    %7 = tpu.matmul %3, %6, %cst_6 {dimension_numbers = #tpu.dot_dimension_numbers<[1], [0], [0], [1], [0, 0, 1, 1], [], []>} : vector<80x32xbf16>, vector<32x32xbf16>, vector<80x32xf32> -> vector<80x32xf32>
    %8 = arith.addf %5, %7 : vector<80x32xf32>
    %c0_7 = arith.constant 0 : index
    %c0_8 = arith.constant 0 : index
    %9 = vector.load %arg4[%c0_7, %c0_8] : memref<1x32xf32, #tpu.memory_space<vmem>>, vector<1x32xf32>
    %10 = vector.broadcast %9 : vector<1x32xf32> to vector<80x32xf32>
    %11 = arith.addf %8, %10 : vector<80x32xf32>
    %cst_9 = arith.constant 0.000000e+00 : f32
    %12 = vector.broadcast %cst_9 : f32 to vector<80x32xf32>
    %13 = arith.maximumf %11, %12 : vector<80x32xf32>
    %14 = arith.truncf %13 : vector<80x32xf32> to vector<80x32xbf16>
    %c0_10 = arith.constant 0 : index
    %c0_11 = arith.constant 0 : index
    %15 = vector.load %arg5[%c0_10, %c0_11] : memref<32x16xbf16, #tpu.memory_space<vmem>>, vector<32x16xbf16>
    %cst_12 = arith.constant dense<0.000000e+00> : vector<80x16xf32>
    %16 = tpu.matmul %14, %15, %cst_12 {dimension_numbers = #tpu.dot_dimension_numbers<[1], [0], [0], [1], [0, 0, 1, 1], [], []>} : vector<80x32xbf16>, vector<32x16xbf16>, vector<80x16xf32> -> vector<80x16xf32>
    %c0_13 = arith.constant 0 : index
    %c0_14 = arith.constant 0 : index
    %17 = vector.load %arg6[%c0_13, %c0_14] : memref<1x16xf32, #tpu.memory_space<vmem>>, vector<1x16xf32>
    %18 = vector.broadcast %17 : vector<1x16xf32> to vector<80x16xf32>
    %19 = arith.addf %16, %18 : vector<80x16xf32>
    %cst_15 = arith.constant 0.000000e+00 : f32
    %20 = vector.broadcast %cst_15 : f32 to vector<80x16xf32>
    %21 = arith.maximumf %19, %20 : vector<80x16xf32>
    %22 = arith.truncf %21 : vector<80x16xf32> to vector<80x16xbf16>
    %c0_16 = arith.constant 0 : index
    %c0_17 = arith.constant 0 : index
    %23 = vector.load %arg7[%c0_16, %c0_17] : memref<8x16xbf16, #tpu.memory_space<vmem>>, vector<8x16xbf16>
    %cst_18 = arith.constant dense<0.000000e+00> : vector<8x80xf32>
    %24 = tpu.matmul %23, %22, %cst_18 {dimension_numbers = #tpu.dot_dimension_numbers<[1], [1], [0], [0], [0, 0, 1, 0], [], []>} : vector<8x16xbf16>, vector<80x16xbf16>, vector<8x80xf32> -> vector<8x80xf32>
    %25 = vector.extract_strided_slice %24 {offsets = [0, 0], sizes = [1, 80], strides = [1, 1]} : vector<8x80xf32> to vector<1x80xf32>
    %c0_19 = arith.constant 0 : index
    %26 = memref.load %arg8[%c0_19] : memref<1xf32, #tpu.memory_space<smem>>
    %27 = vector.broadcast %26 : f32 to vector<1x80xf32>
    %28 = arith.addf %25, %27 : vector<1x80xf32>
    %cst_20 = arith.constant 5.000000e-01 : f32
    %29 = vector.broadcast %cst_20 : f32 to vector<1x80xf32>
    %30 = arith.mulf %29, %28 : vector<1x80xf32>
    %31 = math.tanh %30 : vector<1x80xf32>
    %cst_21 = arith.constant 1.000000e+00 : f32
    %32 = vector.broadcast %cst_21 : f32 to vector<1x80xf32>
    %33 = arith.addf %31, %32 : vector<1x80xf32>
    %cst_22 = arith.constant 5.000000e-01 : f32
    %34 = vector.broadcast %cst_22 : f32 to vector<1x80xf32>
    %35 = arith.mulf %34, %33 : vector<1x80xf32>
    %36 = vector.shape_cast %35 : vector<1x80xf32> to vector<1x1x80xf32>
    %c0_23 = arith.constant 0 : index
    %c0_24 = arith.constant 0 : index
    %c0_25 = arith.constant 0 : index
    %37 = vector.load %arg9[%c0_23, %c0_24, %c0_25] : memref<1x1x80xf32, #tpu.memory_space<vmem>>, vector<1x1x80xf32>
    tpu.vector_store %arg9[%c0_23, %c0_24, %c0_25], %36 {strides = array<i32>} : memref<1x1x80xf32, #tpu.memory_space<vmem>>, vector<1x1x80xf32>,
    return
  }
  func.func @transform_0(%arg0: i32) -> (i32, i32) {
    %c0_i32 = arith.constant 0 : i32
    %c0_i32_0 = arith.constant 0 : i32
    return %arg0, %c0_i32 : i32, i32
  }
  func.func @transform_1(%arg0: i32) -> (i32, i32) {
    %c0_i32 = arith.constant 0 : i32
    %c0_i32_0 = arith.constant 0 : i32
    return %arg0, %c0_i32 : i32, i32
  }
  func.func @transform_2(%arg0: i32) -> (i32, i32) {
    %c0_i32 = arith.constant 0 : i32
    %c0_i32_0 = arith.constant 0 : i32
    %c0_i32_1 = arith.constant 0 : i32
    return %c0_i32, %c0_i32_0 : i32, i32
  }
  func.func @transform_3(%arg0: i32) -> (i32, i32) {
    %c0_i32 = arith.constant 0 : i32
    %c0_i32_0 = arith.constant 0 : i32
    %c0_i32_1 = arith.constant 0 : i32
    return %c0_i32, %c0_i32_0 : i32, i32
  }
  func.func @transform_4(%arg0: i32) -> (i32, i32) {
    %c0_i32 = arith.constant 0 : i32
    %c0_i32_0 = arith.constant 0 : i32
    %c0_i32_1 = arith.constant 0 : i32
    return %c0_i32, %c0_i32_0 : i32, i32
  }
  func.func @transform_5(%arg0: i32) -> (i32, i32) {
    %c0_i32 = arith.constant 0 : i32
    %c0_i32_0 = arith.constant 0 : i32
    %c0_i32_1 = arith.constant 0 : i32
    return %c0_i32, %c0_i32_0 : i32, i32
  }
  func.func @transform_6(%arg0: i32) -> (i32, i32) {
    %c0_i32 = arith.constant 0 : i32
    %c0_i32_0 = arith.constant 0 : i32
    %c0_i32_1 = arith.constant 0 : i32
    return %c0_i32, %c0_i32_0 : i32, i32
  }
  func.func @transform_7(%arg0: i32) -> i32 {
    %c0_i32 = arith.constant 0 : i32
    %c0_i32_0 = arith.constant 0 : i32
    return %c0_i32 : i32
  }
  func.func @transform_8(%arg0: i32) -> (i32, i32, i32) {
    %c0_i32 = arith.constant 0 : i32
    %c0_i32_0 = arith.constant 0 : i32
    %c0_i32_1 = arith.constant 0 : i32
    return %arg0, %c0_i32, %c0_i32_0 : i32, i32, i32
  }
}

</mosaic_0001>

<llo_original>
// kernel: tpu_custom_call.1
$region0: #{tpu_custom_call.1}
  #allocation0 [shape = 'u32[]', space=smem, size = 0x4, offset = 0x4, fixed_abs, tag = 'smem constant byte address 0x4 - core index']
  #allocation1 [shape = 'u32[144,128]{1,0:T(1,128)}', space=vmem, size = 0x12000, scoped, tag = 'internal scratch']
  #allocation2 [shape = 'f32[1]{0:T(128)S(6)}', space=smem, size = 0x200, scoped, tag = 'scoped memory for tpu_custom_call.1']
  %s0 = inlined_call_operand.vmem [shape: f32[80,32], index: 0, kind: input, shape index: {}]
  %s1 = inlined_call_operand.vmem [shape: f32[80,32], index: 1, kind: input, shape index: {}]
  %s2 = inlined_call_operand.vmem [shape: bf16[64,32], index: 2, kind: input, shape index: {}]
  %s3 = inlined_call_operand.vmem [shape: f32[1,32], index: 3, kind: input, shape index: {}]
  %s4 = inlined_call_operand.vmem [shape: bf16[32,16], index: 4, kind: input, shape index: {}]
  %s5 = inlined_call_operand.vmem [shape: f32[1,16], index: 5, kind: input, shape index: {}]
  %s6 = inlined_call_operand.vmem [shape: bf16[8,16], index: 6, kind: input, shape index: {}]
  %s7 = inlined_call_operand.<no memory space> [shape: f32[1], index: 7, kind: input, shape index: {}]
  %s8 = inlined_call_operand.hbm [shape: f32[1,1,80], index: 8, kind: output, shape index: {}]
  %s9 = sld [smem:[#allocation0]]
  $region42: #{tpu_custom_call.1} parent=0
    _
  %s11 = ssub.s32 1, %s9
  %s12 = scalar_select 0, %s11, %s9
  %13 = sst [smem:[#allocation2]] %s7
  $region1: #{tpu_custom_call.1} parent=0
    #allocation3 [shape = 'u8[512]{0}', space=vmem, size = 0x400, scoped, tag = 'output window, operand 0, single buffered']
    #allocation4 [shape = 's32[1]{0}', space=sflag, size = 0x4, scoped, tag = 'scoped memory for tpu_custom_call.1']
    %14 = vsyncpa [#allocation4], 0
    // Predicated region
    $region2: #{tpu_custom_call.1} parent=1 // pred_check
      _
    $region3: #{tpu_custom_call.1} parent=1 // pred_check_branch
      %16 = sbr.rel (0) target = $region5
    $region4: #{tpu_custom_call.1} parent=1 // pred_region
      _
    $region5: #{tpu_custom_call.1} parent=1 // pred_fallthru
      _
    // Predicated region
    $region6: #{tpu_custom_call.1} parent=1 // pred_check
      _
    $region7: #{tpu_custom_call.1} parent=1 // pred_check_branch
      %18 = sbr.rel (0) target = $region9
    $region8: #{tpu_custom_call.1} parent=1 // pred_region
      _
    $region9: #{tpu_custom_call.1} parent=1 // pred_fallthru
      _
    // Predicated region
    $region10: #{tpu_custom_call.1} parent=1 // pred_check
      _
    $region11: #{tpu_custom_call.1} parent=1 // pred_check_branch
      %20 = sbr.rel (0) target = $region13
    $region12: #{tpu_custom_call.1} parent=1 // pred_region
      _
    $region13: #{tpu_custom_call.1} parent=1 // pred_fallthru
      _
    // Predicated region
    $region14: #{tpu_custom_call.1} parent=1 // pred_check
      _
    $region15: #{tpu_custom_call.1} parent=1 // pred_check_branch
      %22 = sbr.rel (0) target = $region17
    $region16: #{tpu_custom_call.1} parent=1 // pred_region
      _
    $region17: #{tpu_custom_call.1} parent=1 // pred_fallthru
      _
    // Predicated region
    $region18: #{tpu_custom_call.1} parent=1 // pred_check
      _
    $region19: #{tpu_custom_call.1} parent=1 // pred_check_branch
      %24 = sbr.rel (0) target = $region21
    $region20: #{tpu_custom_call.1} parent=1 // pred_region
      _
    $region21: #{tpu_custom_call.1} parent=1 // pred_fallthru
      _
    // Predicated region
    $region22: #{tpu_custom_call.1} parent=1 // pred_check
      _
    $region23: #{tpu_custom_call.1} parent=1 // pred_check_branch
      %26 = sbr.rel (0) target = $region25
    $region24: #{tpu_custom_call.1} parent=1 // pred_region
      _
    $region25: #{tpu_custom_call.1} parent=1 // pred_fallthru
      _
    // Predicated region
    $region26: #{tpu_custom_call.1} parent=1 // pred_check
      _
    $region27: #{tpu_custom_call.1} parent=1 // pred_check_branch
      %28 = sbr.rel (0) target = $region29
    $region28: #{tpu_custom_call.1} parent=1 // pred_region
      _
    $region29: #{tpu_custom_call.1} parent=1 // pred_fallthru
      _
    // Predicated region
    $region30: #{tpu_custom_call.1} parent=1 // pred_check
      _
    $region31: #{tpu_custom_call.1} parent=1 // pred_check_branch
      %30 = sbr.rel (0) target = $region33
    $region32: #{tpu_custom_call.1} parent=1 // pred_region
      _
    $region33: #{tpu_custom_call.1} parent=1 // pred_fallthru
      _
    %v32 = vld [vmem:[%s0] sm:$0xff]
    %v33 = vld [vmem:[%s0 + $0x8] sm:$0xff]
    %v34 = vld [vmem:[%s0 + $0x10] sm:$0xff]
    %v35 = vld [vmem:[%s0 + $0x18] sm:$0xff]
    %v36 = vld [vmem:[%s0 + $0x20] sm:$0xff]
    %v37 = vld [vmem:[%s0 + $0x28] sm:$0xff]
    %v38 = vld [vmem:[%s0 + $0x30] sm:$0xff]
    %v39 = vld [vmem:[%s0 + $0x38] sm:$0xff]
    %v40 = vld [vmem:[%s0 + $0x40] sm:$0xff]
    %v41 = vld [vmem:[%s0 + $0x48] sm:$0xff]
    %v42 = vpack.c.bf16 %v33, %v32
    %v43 = vpack.c.bf16 %v35, %v34
    %v44 = vpack.c.bf16 %v37, %v36
    %v45 = vpack.c.bf16 %v39, %v38
    %v46 = vpack.c.bf16 %v41, %v40
    %v47 = vld [vmem:[%s1] sm:$0xff]
    %v48 = vld [vmem:[%s1 + $0x8] sm:$0xff]
    %v49 = vld [vmem:[%s1 + $0x10] sm:$0xff]
    %v50 = vld [vmem:[%s1 + $0x18] sm:$0xff]
    %v51 = vld [vmem:[%s1 + $0x20] sm:$0xff]
    %v52 = vld [vmem:[%s1 + $0x28] sm:$0xff]
    %v53 = vld [vmem:[%s1 + $0x30] sm:$0xff]
    %v54 = vld [vmem:[%s1 + $0x38] sm:$0xff]
    %v55 = vld [vmem:[%s1 + $0x40] sm:$0xff]
    %v56 = vld [vmem:[%s1 + $0x48] sm:$0xff]
    %v57 = vpack.c.bf16 %v48, %v47
    %v58 = vpack.c.bf16 %v50, %v49
    %v59 = vpack.c.bf16 %v52, %v51
    %v60 = vpack.c.bf16 %v54, %v53
    %v61 = vpack.c.bf16 %v56, %v55
    %v62 = vld [vmem:[%s2] sm:$0xf]
    %v63 = vld [vmem:[%s2 + $0x4] sm:$0xf]
    %v64 = vld [vmem:[%s2 + $0x8] sm:$0xf]
    %v65 = vld [vmem:[%s2 + $0xc] sm:$0xf]
    %v66 = vld [vmem:[%s2 + $0x10] sm:$0xf]
    %v67 = vld [vmem:[%s2 + $0x14] sm:$0xf]
    %v68 = vld [vmem:[%s2 + $0x18] sm:$0xf]
    %v69 = vld [vmem:[%s2 + $0x1c] sm:$0xf]
    %v74 = vunpack.c.l.b16 %v66
    %v75 = vunpack.c.l.b16 %v67
    %v76 = vunpack.c.l.b16 %v68
    %v77 = vunpack.c.l.b16 %v69
    %v78 = vpack.c.b16 %v75, %v74
    %v79 = vpack.c.b16 %v77, %v76
    %vm82 = vcmask 261120
    %v84 = vsel %vm82, %v57, 0
    %v87 = vsel %vm82, %v58, 0
    %v90 = vsel %vm82, %v59, 0
    %v93 = vsel %vm82, %v60, 0
    %v96 = vsel %vm82, %v61, 0
    %98 = vmatprep.subr.bf16.mxu0 0
    %99 = vmatpush1.bf16.msra.mxu0 %v78
    %100 = vmatprep.subr.bf16.mxu0 0
    %101 = vmatpush1.bf16.msra.mxu0 %v79
    %102 = vmatprep.subr.bf16.mxu0 0
    %103 = vmatpush1.bf16.msra.mxu0 0
    %104 = vmatprep.subr.bf16.mxu0 0
    %105 = vmatpush1.bf16.msra.mxu0 0
    %106 = vmatprep.subr.bf16.mxu0 0
    %107 = vmatpush1.bf16.msra.mxu0 0
    %108 = vmatprep.subr.bf16.mxu0 0
    %109 = vmatpush1.bf16.msra.mxu0 0
    %110 = vmatprep.subr.bf16.mxu0 0
    %111 = vmatpush1.bf16.msra.mxu0 0
    %112 = vmatprep.subr.bf16.mxu0 0
    %113 = vmatpush1.bf16.msra.mxu0 0
    %114 = vmatprep.subr.bf16.mxu0 0
    %115 = vmatpush1.bf16.msra.mxu0 0
    %116 = vmatprep.subr.bf16.mxu0 0
    %117 = vmatpush1.bf16.msra.mxu0 0
    %118 = vmatprep.subr.bf16.mxu0 0
    %119 = vmatpush1.bf16.msra.mxu0 0
    %120 = vmatprep.subr.bf16.mxu0 0
    %121 = vmatpush1.bf16.msra.mxu0 0
    %122 = vmatprep.subr.bf16.mxu0 0
    %123 = vmatpush1.bf16.msra.mxu0 0
    %124 = vmatprep.subr.bf16.mxu0 0
    %125 = vmatpush1.bf16.msra.mxu0 0
    %126 = vmatprep.subr.bf16.mxu0 0
    %127 = vmatpush1.bf16.msra.mxu0 0
    %128 = vmatprep.subr.bf16.mxu0 0
    %129 = vmatpush1.bf16.msra.mxu0 0
    %130 = vmatprep.mubr.bf16.mxu0 0
    %131 = vmatmul.mubr.bf16.gmra.mrb[0].mxu0 %v84
    %v132 = vpop.f32.mrb[0].mxu0
    %v133 = vadd.f32 0.0, %v132
    %v134 = vpop.f32.mrb[0].mxu0
    %v135 = vpop.f32.mrb[0].mxu0
    %v136 = vadd.f32 0.0, %v135
    %v137 = vpop.f32.mrb[0].mxu0
    %138 = vmatprep.mubr.bf16.mxu0 0
    %139 = vmatmul.mubr.bf16.gmra.mrb[0].mxu0 %v87
    %v140 = vpop.f32.mrb[0].mxu0
    %v141 = vadd.f32 0.0, %v140
    %v142 = vpop.f32.mrb[0].mxu0
    %v143 = vpop.f32.mrb[0].mxu0
    %v144 = vadd.f32 0.0, %v143
    %v145 = vpop.f32.mrb[0].mxu0
    %146 = vmatprep.mubr.bf16.mxu0 0
    %147 = vmatmul.mubr.bf16.gmra.mrb[0].mxu0 %v90
    %v148 = vpop.f32.mrb[0].mxu0
    %v149 = vadd.f32 0.0, %v148
    %v150 = vpop.f32.mrb[0].mxu0
    %v151 = vpop.f32.mrb[0].mxu0
    %v152 = vadd.f32 0.0, %v151
    %v153 = vpop.f32.mrb[0].mxu0
    %154 = vmatprep.mubr.bf16.mxu0 0
    %155 = vmatmul.mubr.bf16.gmra.mrb[0].mxu0 %v93
    %v156 = vpop.f32.mrb[0].mxu0
    %v157 = vadd.f32 0.0, %v156
    %v158 = vpop.f32.mrb[0].mxu0
    %v159 = vpop.f32.mrb[0].mxu0
    %v160 = vadd.f32 0.0, %v159
    %v161 = vpop.f32.mrb[0].mxu0
    %162 = vmatprep.mubr.bf16.mxu0 0
    %163 = vmatmul.mubr.bf16.gmra.mrb[0].mxu0 %v96
    %v164 = vpop.f32.mrb[0].mxu0
    %v165 = vadd.f32 0.0, %v164
    %v166 = vpop.f32.mrb[0].mxu0
    %v167 = vpop.f32.mrb[0].mxu0
    %v168 = vadd.f32 0.0, %v167
    %v169 = vpop.f32.mrb[0].mxu0
    %170 = vdwg.mxu0
    %v175 = vunpack.c.l.b16 %v62
    %v176 = vunpack.c.l.b16 %v63
    %v177 = vunpack.c.l.b16 %v64
    %v178 = vunpack.c.l.b16 %v65
    %v179 = vpack.c.b16 %v176, %v175
    %v180 = vpack.c.b16 %v178, %v177
    %v184 = vsel %vm82, %v42, 0
    %v187 = vsel %vm82, %v43, 0
    %v190 = vsel %vm82, %v44, 0
    %v193 = vsel %vm82, %v45, 0
    %v196 = vsel %vm82, %v46, 0
    %198 = vmatprep.subr.bf16.mxu0 0
    %199 = vmatpush1.bf16.msra.mxu0 %v179
    %200 = vmatprep.subr.bf16.mxu0 0
    %201 = vmatpush1.bf16.msra.mxu0 %v180
    %202 = vmatprep.subr.bf16.mxu0 0
    %203 = vmatpush1.bf16.msra.mxu0 0
    %204 = vmatprep.subr.bf16.mxu0 0
    %205 = vmatpush1.bf16.msra.mxu0 0
    %206 = vmatprep.subr.bf16.mxu0 0
    %207 = vmatpush1.bf16.msra.mxu0 0
    %208 = vmatprep.subr.bf16.mxu0 0
    %209 = vmatpush1.bf16.msra.mxu0 0
    %210 = vmatprep.subr.bf16.mxu0 0
    %211 = vmatpush1.bf16.msra.mxu0 0
    %212 = vmatprep.subr.bf16.mxu0 0
    %213 = vmatpush1.bf16.msra.mxu0 0
    %214 = vmatprep.subr.bf16.mxu0 0
    %215 = vmatpush1.bf16.msra.mxu0 0
    %216 = vmatprep.subr.bf16.mxu0 0
    %217 = vmatpush1.bf16.msra.mxu0 0
    %218 = vmatprep.subr.bf16.mxu0 0
    %219 = vmatpush1.bf16.msra.mxu0 0
    %220 = vmatprep.subr.bf16.mxu0 0
    %221 = vmatpush1.bf16.msra.mxu0 0
    %222 = vmatprep.subr.bf16.mxu0 0
    %223 = vmatpush1.bf16.msra.mxu0 0
    %224 = vmatprep.subr.bf16.mxu0 0
    %225 = vmatpush1.bf16.msra.mxu0 0
    %226 = vmatprep.subr.bf16.mxu0 0
    %227 = vmatpush1.bf16.msra.mxu0 0
    %228 = vmatprep.subr.bf16.mxu0 0
    %229 = vmatpush1.bf16.msra.mxu0 0
    %230 = vmatprep.mubr.bf16.mxu0 0
    %231 = vmatmul.mubr.bf16.gmra.mrb[0].mxu0 %v184
    %v232 = vpop.f32.mrb[0].mxu0
    %v233 = vadd.f32 %v133, %v232
    %v234 = vpop.f32.mrb[0].mxu0
    %v235 = vpop.f32.mrb[0].mxu0
    %v236 = vadd.f32 %v136, %v235
    %v237 = vpop.f32.mrb[0].mxu0
    %238 = vmatprep.mubr.bf16.mxu0 0
    %239 = vmatmul.mubr.bf16.gmra.mrb[0].mxu0 %v187
    %v240 = vpop.f32.mrb[0].mxu0
    %v241 = vadd.f32 %v141, %v240
    %v242 = vpop.f32.mrb[0].mxu0
    %v243 = vpop.f32.mrb[0].mxu0
    %v244 = vadd.f32 %v144, %v243
    %v245 = vpop.f32.mrb[0].mxu0
    %246 = vmatprep.mubr.bf16.mxu0 0
    %247 = vmatmul.mubr.bf16.gmra.mrb[0].mxu0 %v190
    %v248 = vpop.f32.mrb[0].mxu0
    %v249 = vadd.f32 %v149, %v248
    %v250 = vpop.f32.mrb[0].mxu0
    %v251 = vpop.f32.mrb[0].mxu0
    %v252 = vadd.f32 %v152, %v251
    %v253 = vpop.f32.mrb[0].mxu0
    %254 = vmatprep.mubr.bf16.mxu0 0
    %255 = vmatmul.mubr.bf16.gmra.mrb[0].mxu0 %v193
    %v256 = vpop.f32.mrb[0].mxu0
    %v257 = vadd.f32 %v157, %v256
    %v258 = vpop.f32.mrb[0].mxu0
    %v259 = vpop.f32.mrb[0].mxu0
    %v260 = vadd.f32 %v160, %v259
    %v261 = vpop.f32.mrb[0].mxu0
    %262 = vmatprep.mubr.bf16.mxu0 0
    %263 = vmatmul.mubr.bf16.gmra.mrb[0].mxu0 %v196
    %v264 = vpop.f32.mrb[0].mxu0
    %v265 = vadd.f32 %v165, %v264
    %v266 = vpop.f32.mrb[0].mxu0
    %v267 = vpop.f32.mrb[0].mxu0
    %v268 = vadd.f32 %v168, %v267
    %v269 = vpop.f32.mrb[0].mxu0
    %270 = vdwg.mxu0
    %v271 = vld [vmem:[%s3] sm:$0x1]
    %v273 = vlaneseq
    %v274 = vshrl.u32 %v273, 7
    %v275 = vsub.s32 0, %v274
    %v276 = vrot.slane %v271, %v275
    %v278 = vadd.f32 %v233, %v276
    %v279 = vadd.f32 %v236, %v276
    %v280 = vadd.f32 %v241, %v276
    %v281 = vadd.f32 %v244, %v276
    %v282 = vadd.f32 %v249, %v276
    %v283 = vadd.f32 %v252, %v276
    %v284 = vadd.f32 %v257, %v276
    %v285 = vadd.f32 %v260, %v276
    %v286 = vadd.f32 %v265, %v276
    %v287 = vadd.f32 %v268, %v276
    %v288 = vmax.f32 %v278, 0.0
    %v289 = vmax.f32 %v279, 0.0
    %v290 = vmax.f32 %v280, 0.0
    %v291 = vmax.f32 %v281, 0.0
    %v292 = vmax.f32 %v282, 0.0
    %v293 = vmax.f32 %v283, 0.0
    %v294 = vmax.f32 %v284, 0.0
    %v295 = vmax.f32 %v285, 0.0
    %v296 = vmax.f32 %v286, 0.0
    %v297 = vmax.f32 %v287, 0.0
    %v298 = vpack.c.bf16 %v289, %v288
    %v299 = vpack.c.bf16 %v291, %v290
    %v300 = vpack.c.bf16 %v293, %v292
    %v301 = vpack.c.bf16 %v295, %v294
    %v302 = vpack.c.bf16 %v297, %v296
    %v303 = vld [vmem:[%s4] sm:$0xf]
    %v304 = vld [vmem:[%s4 + $0x4] sm:$0xf]
    %v305 = vld [vmem:[%s4 + $0x8] sm:$0xf]
    %v306 = vld [vmem:[%s4 + $0xc] sm:$0xf]
    %v307 = vld [vmem:[%s5] sm:$0x1]
    %v309 = vlaneseq
    %v310 = vshrl.u32 %v309, 7
    %v311 = vsub.s32 0, %v310
    %v312 = vrot.slane %v307, %v311
    %v318 = vunpack.c.l.b16 %v303
    %v319 = vunpack.c.l.b16 %v304
    %v320 = vunpack.c.l.b16 %v305
    %v321 = vunpack.c.l.b16 %v306
    %v322 = vpack.c.b16 %v319, %v318
    %v323 = vpack.c.b16 %v321, %v320
    %v327 = vsel %vm82, %v298, 0
    %v330 = vsel %vm82, %v299, 0
    %v333 = vsel %vm82, %v300, 0
    %v336 = vsel %vm82, %v301, 0
    %v339 = vsel %vm82, %v302, 0
    %341 = vmatprep.subr.bf16.mxu0 0
    %342 = vmatpush1.bf16.msra.mxu0 %v322
    %343 = vmatprep.subr.bf16.mxu0 0
    %344 = vmatpush1.bf16.msra.mxu0 %v323
    %345 = vmatprep.subr.bf16.mxu0 0
    %346 = vmatpush1.bf16.msra.mxu0 0
    %347 = vmatprep.subr.bf16.mxu0 0
    %348 = vmatpush1.bf16.msra.mxu0 0
    %349 = vmatprep.subr.bf16.mxu0 0
    %350 = vmatpush1.bf16.msra.mxu0 0
    %351 = vmatprep.subr.bf16.mxu0 0
    %352 = vmatpush1.bf16.msra.mxu0 0
    %353 = vmatprep.subr.bf16.mxu0 0
    %354 = vmatpush1.bf16.msra.mxu0 0
    %355 = vmatprep.subr.bf16.mxu0 0
    %356 = vmatpush1.bf16.msra.mxu0 0
    %357 = vmatprep.subr.bf16.mxu0 0
    %358 = vmatpush1.bf16.msra.mxu0 0
    %359 = vmatprep.subr.bf16.mxu0 0
    %360 = vmatpush1.bf16.msra.mxu0 0
    %361 = vmatprep.subr.bf16.mxu0 0
    %362 = vmatpush1.bf16.msra.mxu0 0
    %363 = vmatprep.subr.bf16.mxu0 0
    %364 = vmatpush1.bf16.msra.mxu0 0
    %365 = vmatprep.subr.bf16.mxu0 0
    %366 = vmatpush1.bf16.msra.mxu0 0
    %367 = vmatprep.subr.bf16.mxu0 0
    %368 = vmatpush1.bf16.msra.mxu0 0
    %369 = vmatprep.subr.bf16.mxu0 0
    %370 = vmatpush1.bf16.msra.mxu0 0
    %371 = vmatprep.subr.bf16.mxu0 0
    %372 = vmatpush1.bf16.msra.mxu0 0
    %373 = vmatprep.mubr.bf16.mxu0 0
    %374 = vmatmul.mubr.bf16.gmra.mrb[0].mxu0 %v327
    %v375 = vpop.f32.mrb[0].mxu0
    %v376 = vadd.f32 %v312, %v375
    %v377 = vpop.f32.mrb[0].mxu0
    %v378 = vpop.f32.mrb[0].mxu0
    %v379 = vadd.f32 %v312, %v378
    %v380 = vpop.f32.mrb[0].mxu0
    %381 = vmatprep.mubr.bf16.mxu0 0
    %382 = vmatmul.mubr.bf16.gmra.mrb[0].mxu0 %v330
    %v383 = vpop.f32.mrb[0].mxu0
    %v384 = vadd.f32 %v312, %v383
    %v385 = vpop.f32.mrb[0].mxu0
    %v386 = vpop.f32.mrb[0].mxu0
    %v387 = vadd.f32 %v312, %v386
    %v388 = vpop.f32.mrb[0].mxu0
    %389 = vmatprep.mubr.bf16.mxu0 0
    %390 = vmatmul.mubr.bf16.gmra.mrb[0].mxu0 %v333
    %v391 = vpop.f32.mrb[0].mxu0
    %v392 = vadd.f32 %v312, %v391
    %v393 = vpop.f32.mrb[0].mxu0
    %v394 = vpop.f32.mrb[0].mxu0
    %v395 = vadd.f32 %v312, %v394
    %v396 = vpop.f32.mrb[0].mxu0
    %397 = vmatprep.mubr.bf16.mxu0 0
    %398 = vmatmul.mubr.bf16.gmra.mrb[0].mxu0 %v336
    %v399 = vpop.f32.mrb[0].mxu0
    %v400 = vadd.f32 %v312, %v399
    %v401 = vpop.f32.mrb[0].mxu0
    %v402 = vpop.f32.mrb[0].mxu0
    %v403 = vadd.f32 %v312, %v402
    %v404 = vpop.f32.mrb[0].mxu0
    %405 = vmatprep.mubr.bf16.mxu0 0
    %406 = vmatmul.mubr.bf16.gmra.mrb[0].mxu0 %v339
    %v407 = vpop.f32.mrb[0].mxu0
    %v408 = vadd.f32 %v312, %v407
    %v409 = vpop.f32.mrb[0].mxu0
    %v410 = vpop.f32.mrb[0].mxu0
    %v411 = vadd.f32 %v312, %v410
    %v412 = vpop.f32.mrb[0].mxu0
    %413 = vdwg.mxu0
    %v414 = vmax.f32 %v376, 0.0
    %v415 = vmax.f32 %v379, 0.0
    %v416 = vmax.f32 %v384, 0.0
    %v417 = vmax.f32 %v387, 0.0
    %v418 = vmax.f32 %v392, 0.0
    %v419 = vmax.f32 %v395, 0.0
    %v420 = vmax.f32 %v400, 0.0
    %v421 = vmax.f32 %v403, 0.0
    %v422 = vmax.f32 %v408, 0.0
    %v423 = vmax.f32 %v411, 0.0
    %v424 = vpack.c.bf16 %v415, %v414
    %v425 = vpack.c.bf16 %v417, %v416
    %v426 = vpack.c.bf16 %v419, %v418
    %v427 = vpack.c.bf16 %v421, %v420
    %v428 = vpack.c.bf16 %v423, %v422
    %v429 = vld [vmem:[%s6] sm:$0xf]
    %vm430 = vcmask 130048
    %v432 = vsel %vm430, %v429, 0
    %v435 = vsel %vm430, %v424, 0
    %v438 = vsel %vm430, %v425, 0
    %v441 = vsel %vm430, %v426, 0
    %v444 = vsel %vm430, %v427, 0
    %v447 = vsel %vm430, %v428, 0
    %449 = vmatprep.subr.bf16.mxu0 0
    %450 = vmatpush1.bf16.xpose.msra.mxu0 %v435
    %451 = vmatprep.subr.bf16.mxu0 0
    %452 = vmatpush1.bf16.xpose.msra.mxu0 %v438
    %453 = vmatprep.subr.bf16.mxu0 0
    %454 = vmatpush1.bf16.xpose.msra.mxu0 %v441
    %455 = vmatprep.subr.bf16.mxu0 0
    %456 = vmatpush1.bf16.xpose.msra.mxu0 %v444
    %457 = vmatprep.subr.bf16.mxu0 0
    %458 = vmatpush1.bf16.xpose.msra.mxu0 %v447
    %459 = vmatprep.subr.bf16.mxu0 0
    %460 = vmatpush1.bf16.xpose.msra.mxu0 0
    %461 = vmatprep.subr.bf16.mxu0 0
    %462 = vmatpush1.bf16.xpose.msra.mxu0 0
    %463 = vmatprep.subr.bf16.mxu0 0
    %464 = vmatpush1.bf16.xpose.msra.mxu0 0
    %465 = vmatprep.subr.bf16.mxu0 0
    %466 = vmatpush1.bf16.xpose.msra.mxu0 0
    %467 = vmatprep.subr.bf16.mxu0 0
    %468 = vmatpush1.bf16.xpose.msra.mxu0 0
    %469 = vmatprep.subr.bf16.mxu0 0
    %470 = vmatpush1.bf16.xpose.msra.mxu0 0
    %471 = vmatprep.subr.bf16.mxu0 0
    %472 = vmatpush1.bf16.xpose.msra.mxu0 0
    %473 = vmatprep.subr.bf16.mxu0 0
    %474 = vmatpush1.bf16.xpose.msra.mxu0 0
    %475 = vmatprep.subr.bf16.mxu0 0
    %476 = vmatpush1.bf16.xpose.msra.mxu0 0
    %477 = vmatprep.subr.bf16.mxu0 0
    %478 = vmatpush1.bf16.xpose.msra.mxu0 0
    %479 = vmatprep.subr.bf16.mxu0 0
    %480 = vmatpush1.bf16.xpose.msra.mxu0 0
    %481 = vmatprep.mubr.bf16.mxu0 0
    %482 = vmatmul.mubr.bf16.gmra.mrb[0].mxu0 %v432
    %v483 = vpop.f32.mrb[0].mxu0
    %v484 = vadd.f32 0.0, %v483
    %v485 = vpop.f32.mrb[0].mxu0
    %v486 = vpop.f32.mrb[0].mxu0
    %v487 = vpop.f32.mrb[0].mxu0
    %488 = vdwg.mxu0
    %s489 = sld [smem:[#allocation2]]
    %v490 = vstv %s489
    %v491 = vadd.f32 %v484, %v490
    %v492 = vmul.f32 %v491, 0.5
    %v493 = vtanh.pop %v492
    %v494 = vadd.f32 %v493, 1.0
    %v495 = vmul.f32 %v494, 0.5
    %vm496 = vcmask 647168
    %497 = vst.msk [vmem:[#allocation3] sm:$0x1] %vm496, %v495
    // Predicated region
    $region34: #{tpu_custom_call.1} parent=1 // pred_check
      _
    $region35: #{tpu_custom_call.1} parent=1 // pred_check_branch
      %499 = sbr.rel (0) target = $region37
    $region36: #{tpu_custom_call.1} parent=1 // pred_region
      %s501 = ssub.s32 16, 16
      %502 = vsyncadd [#allocation4], %s501
      %s504 = sshll.u32 [#allocation3], 4
      %s505 = int_to_ptr.vmem [resolvable:$true] %s504
      %507 = dma.vmem_to_hbm [thread:$0]  %s505, 16, %s8, [#allocation4]
    $region37: #{tpu_custom_call.1} parent=1 // pred_fallthru
      _
    // Predicated region
    $region38: #{tpu_custom_call.1} parent=1 // pred_check
      _
    $region39: #{tpu_custom_call.1} parent=1 // pred_check_branch
      %509 = sbr.rel (0) target = $region41
    $region40: #{tpu_custom_call.1} parent=1 // pred_region
      %510 = dma.done [#allocation4], 16
    $region41: #{tpu_custom_call.1} parent=1 // pred_fallthru
      _
    %511 = vsyncpa [#allocation4], 1

</llo_original>
